<compile_context>
chip_gen: v7x
topology: tpu7x:2x2x1
jax: 0.10.0
libtpu: 0.0.40
codegen_flags: <defaults>
</compile_context>

<pallas_src>
import functools
import math

import jax
import jax.numpy as jnp
from jax import lax
from jax.experimental import pallas as pl
from jax.experimental.pallas import tpu as pltpu

# ---- module hyper-parameters (from the PyTorch script) ----------------------
HIDDEN_SIZE = 3
NUM_BLOCKS = 1
SPARSITY_THRESHOLD = 0.01
HARD_THRESHOLDING_FRACTION = 0.5
HIDDEN_SIZE_FACTOR = 1
SCALE = 0.02

LANE = 128
CHUNK = 8                        # rows per in-kernel strip (one f32 vreg tile)
VMEM_BLOCK_BUDGET = 24 << 20     # double-buffered in+out blocks (v7x-safe)


# -----------------------------------------------------------------------------
# Pallas kernel.
#   p_ref  : (P,) f32 SMEM   flat packed weights/biases (see _pack_params)
#   xr_ref : (C, SUB, 128)   real part, lane-dense over the B*H*kept axis
#   xi_ref : (C, SUB, 128)   imag part
#   or_ref : (C, SUB, 128)   output real
#   oi_ref : (C, SUB, 128)   output imag
# The channel / block contraction (tiny: C=3) is fully unrolled on the VPU;
# the big row axis is strip-mined by a fori_loop over CHUNK-row tiles.
# -----------------------------------------------------------------------------
def afno_freq_mlp_kernel(p_ref, xr_ref, xi_ref, or_ref, oi_ref, *,
                         C, nb, bs, bsf, lam, chunk, n_chunks, unroll):
    # static offsets into the flat parameter vector (must match _pack_params)
    sz_w1 = nb * bs * bsf
    sz_b1 = nb * bsf
    sz_w2 = nb * bsf * bs
    sz_b2 = nb * bs
    o_w1r = 0
    o_w1s = o_w1r + sz_w1          # w1_real + w1_imag
    o_w1d = o_w1s + sz_w1          # w1_imag - w1_real
    o_b1r = o_w1d + sz_w1
    o_b1i = o_b1r + sz_b1
    o_w2r = o_b1i + sz_b1
    o_w2s = o_w2r + sz_w2
    o_w2d = o_w2s + sz_w2
    o_b2r = o_w2d + sz_w2
    o_b2i = o_b2r + sz_b2

    # Hoist all scalar parameter loads out of the row loop (loop-invariant).
    w1r = [p_ref[o_w1r + t] for t in range(sz_w1)]
    w1s = [p_ref[o_w1s + t] for t in range(sz_w1)]
    w1d = [p_ref[o_w1d + t] for t in range(sz_w1)]
    b1r = [p_ref[o_b1r + t] for t in range(sz_b1)]
    b1i = [p_ref[o_b1i + t] for t in range(sz_b1)]
    w2r = [p_ref[o_w2r + t] for t in range(sz_w2)]
    w2s = [p_ref[o_w2s + t] for t in range(sz_w2)]
    w2d = [p_ref[o_w2d + t] for t in range(sz_w2)]
    b2r = [p_ref[o_b2r + t] for t in range(sz_b2)]
    b2i = [p_ref[o_b2i + t] for t in range(sz_b2)]

    def row_body(r, carry):
        off = pl.multiple_of(r * chunk, chunk)
        rs = pl.ds(off, chunk)
        for k in range(nb):            # block-diagonal: never densified
            xr_l, xi_l, xs_l = [], [], []
            for i in range(bs):
                ci = k * bs + i
                re = xr_ref[ci, rs, :]
                im = xi_ref[ci, rs, :]
                xr_l.append(re)
                xi_l.append(im)
                xs_l.append(re + im)   # shared term of the Gauss product

            # ---- layer 1: complex matmul (3-mult Gauss) + bias + ReLU ------
            hr, hi, hs = [], [], []
            for u in range(bsf):
                acc_r = None
                acc_i = None
                for i in range(bs):
                    widx = (k * bs + i) * bsf + u
                    k1 = w1r[widx] * xs_l[i]
                    t_r = k1 - w1s[widx] * xi_l[i]
                    t_i = k1 + w1d[widx] * xr_l[i]
                    acc_r = t_r if acc_r is None else acc_r + t_r
                    acc_i = t_i if acc_i is None else acc_i + t_i
                h_r = jnp.maximum(acc_r + b1r[k * bsf + u], 0.0)
                h_i = jnp.maximum(acc_i + b1i[k * bsf + u], 0.0)
                hr.append(h_r)
                hi.append(h_i)
                hs.append(h_r + h_i)

            # ---- layer 2: complex matmul + bias + softshrink ---------------
            for j in range(bs):
                acc_r = None
                acc_i = None
                for u in range(bsf):
                    widx = (k * bsf + u) * bs + j
                    k1 = w2r[widx] * hs[u]
                    t_r = k1 - w2s[widx] * hi[u]
                    t_i = k1 + w2d[widx] * hr[u]
                    acc_r = t_r if acc_r is None else acc_r + t_r
                    acc_i = t_i if acc_i is None else acc_i + t_i
                co = k * bs + j
                out_r = acc_r + b2r[k * bs + j]
                out_i = acc_i + b2i[k * bs + j]
                # softshrink(v) = v - clip(v, -lam, lam)   (3 VALU ops)
                or_ref[co, rs, :] = out_r - jnp.clip(out_r, -lam, lam)
                oi_ref[co, rs, :] = out_i - jnp.clip(out_i, -lam, lam)
        return carry

    lax.fori_loop(0, n_chunks, row_body, 0, unroll=unroll)


def _pack_params(w1, b1, w2, b2):
    """Flatten weights/biases (with Gauss-trick combinations) into one f32 vec."""
    w1r, w1i = w1[0], w1[1]                # (nb, bs, bsf)
    w2r, w2i = w2[0], w2[1]                # (nb, bsf, bs)
    parts = [
        w1r, w1r + w1i, w1i - w1r,
        b1[0], b1[1],
        w2r, w2r + w2i, w2i - w2r,
        b2[0], b2[1],
    ]
    return jnp.concatenate([jnp.ravel(p) for p in parts]).astype(jnp.float32)


# -----------------------------------------------------------------------------
# Wrapper: FFT glue in JAX, hot path in the Pallas kernel.
# -----------------------------------------------------------------------------
def afno2d_forward(x, params):
    # TODO(synk): rfft2 / irfft2 have no Pallas TPU primitive; the FFTs stay in
    # plain JAX (XLA) around the Pallas frequency-domain MLP kernel.
    w1, b1, w2, b2 = params
    bias = x
    dtype = x.dtype
    xf = x.astype(jnp.float32)
    B, N, C = xf.shape
    H = W = int(math.sqrt(N))
    nb = NUM_BLOCKS
    bs = C // nb
    bsf = bs * HIDDEN_SIZE_FACTOR

    xg = xf.reshape(B, H, W, C)
    xfreq = jnp.fft.rfft2(xg, axes=(1, 2), norm="ortho")        # (B, H, Wf, C)
    Wf = xfreq.shape[2]
    kept = min(int((N // 2 + 1) * HARD_THRESHOLDING_FRACTION), Wf)

    # Only kept modes go through the kernel; discarded modes softshrink to
    # exactly zero so they are re-inserted as zeros (via pad) afterwards.
    xk = xfreq[:, :, :kept, :]                                   # (B,H,kept,C)
    M = B * H * kept

    # Lane-dense layout: real and imag as separate (C, M) slabs, M spread over
    # (sublane, lane) tiles of (sub, 128).  No concatenation (extra HBM pass).
    xr = jnp.moveaxis(jnp.real(xk), -1, 0).reshape(C, M)
    xi = jnp.moveaxis(jnp.imag(xk), -1, 0).reshape(C, M)

    rows = -(-M // LANE)

    # ---- DMA block sizing: as large as the VMEM budget allows ---------------
    # per-row VMEM cost = (in + out) * (re + im) * double-buffer * C * 128 * 4B
    bytes_per_row = 2 * 2 * 2 * C * LANE * 4
    sub = CHUNK
    while sub * 2 * bytes_per_row <= VMEM_BLOCK_BUDGET:
        sub *= 2
    # keep >= 2 grid steps so the pipeline can double-buffer (>=4 preferred on
    # v7x megacore; real AFNO sizes give many more steps anyway).
    while sub > CHUNK and rows < 2 * sub:
        sub //= 2

    rows_p = -(-rows // sub) * sub
    Mp = rows_p * LANE
    nsteps = rows_p // sub
    n_chunks = sub // CHUNK
    unroll = 2 if n_chunks >= 2 else 1

    pad = Mp - M
    xr = jnp.pad(xr, ((0, 0), (0, pad))).reshape(C, rows_p, LANE)
    xi = jnp.pad(xi, ((0, 0), (0, pad))).reshape(C, rows_p, LANE)

    pvec = _pack_params(w1, b1, w2, b2)

    kernel = functools.partial(
        afno_freq_mlp_kernel, C=C, nb=nb, bs=bs, bsf=bsf,
        lam=SPARSITY_THRESHOLD, chunk=CHUNK, n_chunks=n_chunks, unroll=unroll)

    block_bytes = bytes_per_row * sub
    vmem_limit = int(min(block_bytes + (16 << 20), 48 << 20))   # v7x-safe

    flops = int(Mp) * nb * (14 * bs * bsf + 8 * (bs + bsf))
    bytes_accessed = 4 * C * Mp * 4 + pvec.size * 4

    in_data_spec = lambda: pl.BlockSpec((C, sub, LANE), lambda i: (0, i, 0))

    out_r, out_i = pl.pallas_call(
        kernel,
        out_shape=(jax.ShapeDtypeStruct((C, rows_p, LANE), jnp.float32),
                   jax.ShapeDtypeStruct((C, rows_p, LANE), jnp.float32)),
        grid=(nsteps,),
        in_specs=[
            pl.BlockSpec(memory_space=pltpu.MemorySpace.SMEM),   # packed params
            in_data_spec(),                                      # real
            in_data_spec(),                                      # imag
        ],
        out_specs=(in_data_spec(), in_data_spec()),
        compiler_params=pltpu.CompilerParams(
            dimension_semantics=("parallel",),
            vmem_limit_bytes=vmem_limit),
        cost_estimate=pl.CostEstimate(flops=flops, transcendentals=0,
                                      bytes_accessed=bytes_accessed),
    )(pvec, xr, xi)

    # Padded tail rows (M..Mp) may hold softshrink(b2) != 0; keep the [:, :M]
    # slice before reshaping back.
    o_r = jnp.moveaxis(out_r.reshape(C, Mp)[:, :M].reshape(C, B, H, kept), 0, -1)
    o_i = jnp.moveaxis(out_i.reshape(C, Mp)[:, :M].reshape(C, B, H, kept), 0, -1)
    ok = (o_r + 1j * o_i).astype(jnp.complex64)                  # (B,H,kept,C)
    ofull = jnp.pad(ok, ((0, 0), (0, 0), (0, Wf - kept), (0, 0)))
    y = jnp.fft.irfft2(ofull, s=(H, W), axes=(1, 2), norm="ortho")
    return y.reshape(B, N, C).astype(dtype) + bias


# -----------------------------------------------------------------------------
# Pure-JAX reference (mirrors the PyTorch einsum path) for a sanity check.
# -----------------------------------------------------------------------------
def _softshrink_ref(v, lam):
    return jnp.where(v > lam, v - lam, jnp.where(v < -lam, v + lam, 0.0))


def afno2d_reference(x, params):
    w1, b1, w2, b2 = params
    bias = x
    dtype = x.dtype
    xf = x.astype(jnp.float32)
    B, N, C = xf.shape
    H = W = int(math.sqrt(N))
    xg = xf.reshape(B, H, W, C)
    xq = jnp.fft.rfft2(xg, axes=(1, 2), norm="ortho")
    Wf = xq.shape[2]
    nb, bs = NUM_BLOCKS, C // NUM_BLOCKS
    xq = xq.reshape(B, H, Wf, nb, bs)
    km = min(int((N // 2 + 1) * HARD_THRESHOLDING_FRACTION), Wf)
    xk = xq[:, :, :km]
    ein = lambda a, w: jnp.einsum("...bi,bio->...bo", a, w)
    o1r = jax.nn.relu(ein(xk.real, w1[0]) - ein(xk.imag, w1[1]) + b1[0])
    o1i = jax.nn.relu(ein(xk.imag, w1[0]) + ein(xk.real, w1[1]) + b1[1])
    o2r = ein(o1r, w2[0]) - ein(o1i, w2[1]) + b2[0]
    o2i = ein(o1i, w2[0]) + ein(o1r, w2[1]) + b2[1]
    full_r = jnp.zeros((B, H, Wf, nb, bs), jnp.float32).at[:, :, :km].set(o2r)
    full_i = jnp.zeros((B, H, Wf, nb, bs), jnp.float32).at[:, :, :km].set(o2i)
    o = (_softshrink_ref(full_r, SPARSITY_THRESHOLD)
         + 1j * _softshrink_ref(full_i, SPARSITY_THRESHOLD)).reshape(B, H, Wf, C)
    y = jnp.fft.irfft2(o, s=(H, W), axes=(1, 2), norm="ortho")
    return y.reshape(B, N, C).astype(dtype) + bias


if __name__ == "__main__":
    key = jax.random.PRNGKey(0)
    k1, k2, k3, k4, kx = jax.random.split(key, 5)

    bs = HIDDEN_SIZE // NUM_BLOCKS
    bsf = bs * HIDDEN_SIZE_FACTOR
    w1 = SCALE * jax.random.normal(k1, (2, NUM_BLOCKS, bs, bsf), jnp.float32)
    b1 = SCALE * jax.random.normal(k2, (2, NUM_BLOCKS, bsf), jnp.float32)
    w2 = SCALE * jax.random.normal(k3, (2, NUM_BLOCKS, bsf, bs), jnp.float32)
    b2 = SCALE * jax.random.normal(k4, (2, NUM_BLOCKS, bs), jnp.float32)
    params = (w1, b1, w2, b2)

    # x: (B, N, C) with N a perfect square (H = W = 32) -> exercises >=2 grid steps
    x = jax.random.normal(kx, (2, 1024, HIDDEN_SIZE), jnp.float32)

    out = jax.block_until_ready(afno2d_forward(x, params))
    ref = jax.block_until_ready(afno2d_reference(x, params))

    assert out.shape == x.shape and out.dtype == x.dtype
    assert jnp.allclose(out, ref, atol=1e-3, rtol=1e-2), "mismatch vs reference"

    print("KERNEL_OK")
</pallas_src>

<mosaic_0001>
module attributes {stable_mosaic.version = 11 : i64} {
  func.func @afno_freq_mlp_kernel(%arg0: i32, %arg1: memref<66xf32, #tpu.memory_space<smem>>, %arg2: memref<3x8x128xf32, #tpu.memory_space<vmem>>, %arg3: memref<3x8x128xf32, #tpu.memory_space<vmem>>, %arg4: memref<3x8x128xf32, #tpu.memory_space<vmem>>, %arg5: memref<3x8x128xf32, #tpu.memory_space<vmem>>) attributes {dimension_semantics = [#tpu.dimension_semantics<parallel>], iteration_bounds = array<i64: 2>, scalar_prefetch = 0 : i64, scratch_operands = 0 : i64, tpu.core_type = #tpu.core_type<tc>, window_params = [{transform_indices = @transform_0, window_bounds = array<i64: 66>}, {transform_indices = @transform_1, window_bounds = array<i64: 3, 8, 128>}, {transform_indices = @transform_2, window_bounds = array<i64: 3, 8, 128>}, {transform_indices = @transform_3, window_bounds = array<i64: 3, 8, 128>}, {transform_indices = @transform_4, window_bounds = array<i64: 3, 8, 128>}]} {
    %c0 = arith.constant 0 : index
    %0 = memref.load %arg1[%c0] : memref<66xf32, #tpu.memory_space<smem>>
    %c1 = arith.constant 1 : index
    %1 = memref.load %arg1[%c1] : memref<66xf32, #tpu.memory_space<smem>>
    %c2 = arith.constant 2 : index
    %2 = memref.load %arg1[%c2] : memref<66xf32, #tpu.memory_space<smem>>
    %c3 = arith.constant 3 : index
    %3 = memref.load %arg1[%c3] : memref<66xf32, #tpu.memory_space<smem>>
    %c4 = arith.constant 4 : index
    %4 = memref.load %arg1[%c4] : memref<66xf32, #tpu.memory_space<smem>>
    %c5 = arith.constant 5 : index
    %5 = memref.load %arg1[%c5] : memref<66xf32, #tpu.memory_space<smem>>
    %c6 = arith.constant 6 : index
    %6 = memref.load %arg1[%c6] : memref<66xf32, #tpu.memory_space<smem>>
    %c7 = arith.constant 7 : index
    %7 = memref.load %arg1[%c7] : memref<66xf32, #tpu.memory_space<smem>>
    %c8 = arith.constant 8 : index
    %8 = memref.load %arg1[%c8] : memref<66xf32, #tpu.memory_space<smem>>
    %c9 = arith.constant 9 : index
    %9 = memref.load %arg1[%c9] : memref<66xf32, #tpu.memory_space<smem>>
    %c10 = arith.constant 10 : index
    %10 = memref.load %arg1[%c10] : memref<66xf32, #tpu.memory_space<smem>>
    %c11 = arith.constant 11 : index
    %11 = memref.load %arg1[%c11] : memref<66xf32, #tpu.memory_space<smem>>
    %c12 = arith.constant 12 : index
    %12 = memref.load %arg1[%c12] : memref<66xf32, #tpu.memory_space<smem>>
    %c13 = arith.constant 13 : index
    %13 = memref.load %arg1[%c13] : memref<66xf32, #tpu.memory_space<smem>>
    %c14 = arith.constant 14 : index
    %14 = memref.load %arg1[%c14] : memref<66xf32, #tpu.memory_space<smem>>
    %c15 = arith.constant 15 : index
    %15 = memref.load %arg1[%c15] : memref<66xf32, #tpu.memory_space<smem>>
    %c16 = arith.constant 16 : index
    %16 = memref.load %arg1[%c16] : memref<66xf32, #tpu.memory_space<smem>>
    %c17 = arith.constant 17 : index
    %17 = memref.load %arg1[%c17] : memref<66xf32, #tpu.memory_space<smem>>
    %c18 = arith.constant 18 : index
    %18 = memref.load %arg1[%c18] : memref<66xf32, #tpu.memory_space<smem>>
    %c19 = arith.constant 19 : index
    %19 = memref.load %arg1[%c19] : memref<66xf32, #tpu.memory_space<smem>>
    %c20 = arith.constant 20 : index
    %20 = memref.load %arg1[%c20] : memref<66xf32, #tpu.memory_space<smem>>
    %c21 = arith.constant 21 : index
    %21 = memref.load %arg1[%c21] : memref<66xf32, #tpu.memory_space<smem>>
    %c22 = arith.constant 22 : index
    %22 = memref.load %arg1[%c22] : memref<66xf32, #tpu.memory_space<smem>>
    %c23 = arith.constant 23 : index
    %23 = memref.load %arg1[%c23] : memref<66xf32, #tpu.memory_space<smem>>
    %c24 = arith.constant 24 : index
    %24 = memref.load %arg1[%c24] : memref<66xf32, #tpu.memory_space<smem>>
    %c25 = arith.constant 25 : index
    %25 = memref.load %arg1[%c25] : memref<66xf32, #tpu.memory_space<smem>>
    %c26 = arith.constant 26 : index
    %26 = memref.load %arg1[%c26] : memref<66xf32, #tpu.memory_space<smem>>
    %c27 = arith.constant 27 : index
    %27 = memref.load %arg1[%c27] : memref<66xf32, #tpu.memory_space<smem>>
    %c28 = arith.constant 28 : index
    %28 = memref.load %arg1[%c28] : memref<66xf32, #tpu.memory_space<smem>>
    %c29 = arith.constant 29 : index
    %29 = memref.load %arg1[%c29] : memref<66xf32, #tpu.memory_space<smem>>
    %c30 = arith.constant 30 : index
    %30 = memref.load %arg1[%c30] : memref<66xf32, #tpu.memory_space<smem>>
    %c31 = arith.constant 31 : index
    %31 = memref.load %arg1[%c31] : memref<66xf32, #tpu.memory_space<smem>>
    %c32 = arith.constant 32 : index
    %32 = memref.load %arg1[%c32] : memref<66xf32, #tpu.memory_space<smem>>
    %c33 = arith.constant 33 : index
    %33 = memref.load %arg1[%c33] : memref<66xf32, #tpu.memory_space<smem>>
    %c34 = arith.constant 34 : index
    %34 = memref.load %arg1[%c34] : memref<66xf32, #tpu.memory_space<smem>>
    %c35 = arith.constant 35 : index
    %35 = memref.load %arg1[%c35] : memref<66xf32, #tpu.memory_space<smem>>
    %c36 = arith.constant 36 : index
    %36 = memref.load %arg1[%c36] : memref<66xf32, #tpu.memory_space<smem>>
    %c37 = arith.constant 37 : index
    %37 = memref.load %arg1[%c37] : memref<66xf32, #tpu.memory_space<smem>>
    %c38 = arith.constant 38 : index
    %38 = memref.load %arg1[%c38] : memref<66xf32, #tpu.memory_space<smem>>
    %c39 = arith.constant 39 : index
    %39 = memref.load %arg1[%c39] : memref<66xf32, #tpu.memory_space<smem>>
    %c40 = arith.constant 40 : index
    %40 = memref.load %arg1[%c40] : memref<66xf32, #tpu.memory_space<smem>>
    %c41 = arith.constant 41 : index
    %41 = memref.load %arg1[%c41] : memref<66xf32, #tpu.memory_space<smem>>
    %c42 = arith.constant 42 : index
    %42 = memref.load %arg1[%c42] : memref<66xf32, #tpu.memory_space<smem>>
    %c43 = arith.constant 43 : index
    %43 = memref.load %arg1[%c43] : memref<66xf32, #tpu.memory_space<smem>>
    %c44 = arith.constant 44 : index
    %44 = memref.load %arg1[%c44] : memref<66xf32, #tpu.memory_space<smem>>
    %c45 = arith.constant 45 : index
    %45 = memref.load %arg1[%c45] : memref<66xf32, #tpu.memory_space<smem>>
    %c46 = arith.constant 46 : index
    %46 = memref.load %arg1[%c46] : memref<66xf32, #tpu.memory_space<smem>>
    %c47 = arith.constant 47 : index
    %47 = memref.load %arg1[%c47] : memref<66xf32, #tpu.memory_space<smem>>
    %c48 = arith.constant 48 : index
    %48 = memref.load %arg1[%c48] : memref<66xf32, #tpu.memory_space<smem>>
    %c49 = arith.constant 49 : index
    %49 = memref.load %arg1[%c49] : memref<66xf32, #tpu.memory_space<smem>>
    %c50 = arith.constant 50 : index
    %50 = memref.load %arg1[%c50] : memref<66xf32, #tpu.memory_space<smem>>
    %c51 = arith.constant 51 : index
    %51 = memref.load %arg1[%c51] : memref<66xf32, #tpu.memory_space<smem>>
    %c52 = arith.constant 52 : index
    %52 = memref.load %arg1[%c52] : memref<66xf32, #tpu.memory_space<smem>>
    %c53 = arith.constant 53 : index
    %53 = memref.load %arg1[%c53] : memref<66xf32, #tpu.memory_space<smem>>
    %c54 = arith.constant 54 : index
    %54 = memref.load %arg1[%c54] : memref<66xf32, #tpu.memory_space<smem>>
    %c55 = arith.constant 55 : index
    %55 = memref.load %arg1[%c55] : memref<66xf32, #tpu.memory_space<smem>>
    %c56 = arith.constant 56 : index
    %56 = memref.load %arg1[%c56] : memref<66xf32, #tpu.memory_space<smem>>
    %c57 = arith.constant 57 : index
    %57 = memref.load %arg1[%c57] : memref<66xf32, #tpu.memory_space<smem>>
    %c58 = arith.constant 58 : index
    %58 = memref.load %arg1[%c58] : memref<66xf32, #tpu.memory_space<smem>>
    %c59 = arith.constant 59 : index
    %59 = memref.load %arg1[%c59] : memref<66xf32, #tpu.memory_space<smem>>
    %c60 = arith.constant 60 : index
    %60 = memref.load %arg1[%c60] : memref<66xf32, #tpu.memory_space<smem>>
    %c61 = arith.constant 61 : index
    %61 = memref.load %arg1[%c61] : memref<66xf32, #tpu.memory_space<smem>>
    %c62 = arith.constant 62 : index
    %62 = memref.load %arg1[%c62] : memref<66xf32, #tpu.memory_space<smem>>
    %c63 = arith.constant 63 : index
    %63 = memref.load %arg1[%c63] : memref<66xf32, #tpu.memory_space<smem>>
    %c64 = arith.constant 64 : index
    %64 = memref.load %arg1[%c64] : memref<66xf32, #tpu.memory_space<smem>>
    %c65 = arith.constant 65 : index
    %65 = memref.load %arg1[%c65] : memref<66xf32, #tpu.memory_space<smem>>
    %c0_i32 = arith.constant 0 : i32
    %c8_i32 = arith.constant 8 : i32
    %66 = arith.muli %c0_i32, %c8_i32 : i32
    %67 = tpu.assume_multiple %66, 8 : i32
    %c0_0 = arith.constant 0 : index
    %68 = arith.index_cast %67 : i32 to index
    %c0_1 = arith.constant 0 : index
    %69 = vector.load %arg2[%c0_0, %68, %c0_1] : memref<3x8x128xf32, #tpu.memory_space<vmem>>, vector<1x8x128xf32>
    %70 = vector.shape_cast %69 : vector<1x8x128xf32> to vector<8x128xf32>
    %c0_2 = arith.constant 0 : index
    %71 = arith.index_cast %67 : i32 to index
    %c0_3 = arith.constant 0 : index
    %72 = vector.load %arg3[%c0_2, %71, %c0_3] : memref<3x8x128xf32, #tpu.memory_space<vmem>>, vector<1x8x128xf32>
    %73 = vector.shape_cast %72 : vector<1x8x128xf32> to vector<8x128xf32>
    %74 = arith.addf %70, %73 : vector<8x128xf32>
    %c1_4 = arith.constant 1 : index
    %75 = arith.index_cast %67 : i32 to index
    %c0_5 = arith.constant 0 : index
    %76 = vector.load %arg2[%c1_4, %75, %c0_5] : memref<3x8x128xf32, #tpu.memory_space<vmem>>, vector<1x8x128xf32>
    %77 = vector.shape_cast %76 : vector<1x8x128xf32> to vector<8x128xf32>
    %c1_6 = arith.constant 1 : index
    %78 = arith.index_cast %67 : i32 to index
    %c0_7 = arith.constant 0 : index
    %79 = vector.load %arg3[%c1_6, %78, %c0_7] : memref<3x8x128xf32, #tpu.memory_space<vmem>>, vector<1x8x128xf32>
    %80 = vector.shape_cast %79 : vector<1x8x128xf32> to vector<8x128xf32>
    %81 = arith.addf %77, %80 : vector<8x128xf32>
    %c2_8 = arith.constant 2 : index
    %82 = arith.index_cast %67 : i32 to index
    %c0_9 = arith.constant 0 : index
    %83 = vector.load %arg2[%c2_8, %82, %c0_9] : memref<3x8x128xf32, #tpu.memory_space<vmem>>, vector<1x8x128xf32>
    %84 = vector.shape_cast %83 : vector<1x8x128xf32> to vector<8x128xf32>
    %c2_10 = arith.constant 2 : index
    %85 = arith.index_cast %67 : i32 to index
    %c0_11 = arith.constant 0 : index
    %86 = vector.load %arg3[%c2_10, %85, %c0_11] : memref<3x8x128xf32, #tpu.memory_space<vmem>>, vector<1x8x128xf32>
    %87 = vector.shape_cast %86 : vector<1x8x128xf32> to vector<8x128xf32>
    %88 = arith.addf %84, %87 : vector<8x128xf32>
    %89 = vector.broadcast %0 : f32 to vector<8x128xf32>
    %90 = arith.mulf %89, %74 : vector<8x128xf32>
    %91 = vector.broadcast %9 : f32 to vector<8x128xf32>
    %92 = arith.mulf %91, %73 : vector<8x128xf32>
    %93 = arith.subf %90, %92 : vector<8x128xf32>
    %94 = vector.broadcast %18 : f32 to vector<8x128xf32>
    %95 = arith.mulf %94, %70 : vector<8x128xf32>
    %96 = arith.addf %90, %95 : vector<8x128xf32>
    %97 = vector.broadcast %3 : f32 to vector<8x128xf32>
    %98 = arith.mulf %97, %81 : vector<8x128xf32>
    %99 = vector.broadcast %12 : f32 to vector<8x128xf32>
    %100 = arith.mulf %99, %80 : vector<8x128xf32>
    %101 = arith.subf %98, %100 : vector<8x128xf32>
    %102 = vector.broadcast %21 : f32 to vector<8x128xf32>
    %103 = arith.mulf %102, %77 : vector<8x128xf32>
    %104 = arith.addf %98, %103 : vector<8x128xf32>
    %105 = arith.addf %93, %101 : vector<8x128xf32>
    %106 = arith.addf %96, %104 : vector<8x128xf32>
    %107 = vector.broadcast %6 : f32 to vector<8x128xf32>
    %108 = arith.mulf %107, %88 : vector<8x128xf32>
    %109 = vector.broadcast %15 : f32 to vector<8x128xf32>
    %110 = arith.mulf %109, %87 : vector<8x128xf32>
    %111 = arith.subf %108, %110 : vector<8x128xf32>
    %112 = vector.broadcast %24 : f32 to vector<8x128xf32>
    %113 = arith.mulf %112, %84 : vector<8x128xf32>
    %114 = arith.addf %108, %113 : vector<8x128xf32>
    %115 = arith.addf %105, %111 : vector<8x128xf32>
    %116 = arith.addf %106, %114 : vector<8x128xf32>
    %117 = vector.broadcast %27 : f32 to vector<8x128xf32>
    %118 = arith.addf %115, %117 : vector<8x128xf32>
    %cst = arith.constant 0.000000e+00 : f32
    %119 = vector.broadcast %cst : f32 to vector<8x128xf32>
    %120 = arith.maximumf %118, %119 : vector<8x128xf32>
    %121 = vector.broadcast %30 : f32 to vector<8x128xf32>
    %122 = arith.addf %116, %121 : vector<8x128xf32>
    %cst_12 = arith.constant 0.000000e+00 : f32
    %123 = vector.broadcast %cst_12 : f32 to vector<8x128xf32>
    %124 = arith.maximumf %122, %123 : vector<8x128xf32>
    %125 = arith.addf %120, %124 : vector<8x128xf32>
    %126 = vector.broadcast %1 : f32 to vector<8x128xf32>
    %127 = arith.mulf %126, %74 : vector<8x128xf32>
    %128 = vector.broadcast %10 : f32 to vector<8x128xf32>
    %129 = arith.mulf %128, %73 : vector<8x128xf32>
    %130 = arith.subf %127, %129 : vector<8x128xf32>
    %131 = vector.broadcast %19 : f32 to vector<8x128xf32>
    %132 = arith.mulf %131, %70 : vector<8x128xf32>
    %133 = arith.addf %127, %132 : vector<8x128xf32>
    %134 = vector.broadcast %4 : f32 to vector<8x128xf32>
    %135 = arith.mulf %134, %81 : vector<8x128xf32>
    %136 = vector.broadcast %13 : f32 to vector<8x128xf32>
    %137 = arith.mulf %136, %80 : vector<8x128xf32>
    %138 = arith.subf %135, %137 : vector<8x128xf32>
    %139 = vector.broadcast %22 : f32 to vector<8x128xf32>
    %140 = arith.mulf %139, %77 : vector<8x128xf32>
    %141 = arith.addf %135, %140 : vector<8x128xf32>
    %142 = arith.addf %130, %138 : vector<8x128xf32>
    %143 = arith.addf %133, %141 : vector<8x128xf32>
    %144 = vector.broadcast %7 : f32 to vector<8x128xf32>
    %145 = arith.mulf %144, %88 : vector<8x128xf32>
    %146 = vector.broadcast %16 : f32 to vector<8x128xf32>
    %147 = arith.mulf %146, %87 : vector<8x128xf32>
    %148 = arith.subf %145, %147 : vector<8x128xf32>
    %149 = vector.broadcast %25 : f32 to vector<8x128xf32>
    %150 = arith.mulf %149, %84 : vector<8x128xf32>
    %151 = arith.addf %145, %150 : vector<8x128xf32>
    %152 = arith.addf %142, %148 : vector<8x128xf32>
    %153 = arith.addf %143, %151 : vector<8x128xf32>
    %154 = vector.broadcast %28 : f32 to vector<8x128xf32>
    %155 = arith.addf %152, %154 : vector<8x128xf32>
    %cst_13 = arith.constant 0.000000e+00 : f32
    %156 = vector.broadcast %cst_13 : f32 to vector<8x128xf32>
    %157 = arith.maximumf %155, %156 : vector<8x128xf32>
    %158 = vector.broadcast %31 : f32 to vector<8x128xf32>
    %159 = arith.addf %153, %158 : vector<8x128xf32>
    %cst_14 = arith.constant 0.000000e+00 : f32
    %160 = vector.broadcast %cst_14 : f32 to vector<8x128xf32>
    %161 = arith.maximumf %159, %160 : vector<8x128xf32>
    %162 = arith.addf %157, %161 : vector<8x128xf32>
    %163 = vector.broadcast %2 : f32 to vector<8x128xf32>
    %164 = arith.mulf %163, %74 : vector<8x128xf32>
    %165 = vector.broadcast %11 : f32 to vector<8x128xf32>
    %166 = arith.mulf %165, %73 : vector<8x128xf32>
    %167 = arith.subf %164, %166 : vector<8x128xf32>
    %168 = vector.broadcast %20 : f32 to vector<8x128xf32>
    %169 = arith.mulf %168, %70 : vector<8x128xf32>
    %170 = arith.addf %164, %169 : vector<8x128xf32>
    %171 = vector.broadcast %5 : f32 to vector<8x128xf32>
    %172 = arith.mulf %171, %81 : vector<8x128xf32>
    %173 = vector.broadcast %14 : f32 to vector<8x128xf32>
    %174 = arith.mulf %173, %80 : vector<8x128xf32>
    %175 = arith.subf %172, %174 : vector<8x128xf32>
    %176 = vector.broadcast %23 : f32 to vector<8x128xf32>
    %177 = arith.mulf %176, %77 : vector<8x128xf32>
    %178 = arith.addf %172, %177 : vector<8x128xf32>
    %179 = arith.addf %167, %175 : vector<8x128xf32>
    %180 = arith.addf %170, %178 : vector<8x128xf32>
    %181 = vector.broadcast %8 : f32 to vector<8x128xf32>
    %182 = arith.mulf %181, %88 : vector<8x128xf32>
    %183 = vector.broadcast %17 : f32 to vector<8x128xf32>
    %184 = arith.mulf %183, %87 : vector<8x128xf32>
    %185 = arith.subf %182, %184 : vector<8x128xf32>
    %186 = vector.broadcast %26 : f32 to vector<8x128xf32>
    %187 = arith.mulf %186, %84 : vector<8x128xf32>
    %188 = arith.addf %182, %187 : vector<8x128xf32>
    %189 = arith.addf %179, %185 : vector<8x128xf32>
    %190 = arith.addf %180, %188 : vector<8x128xf32>
    %191 = vector.broadcast %29 : f32 to vector<8x128xf32>
    %192 = arith.addf %189, %191 : vector<8x128xf32>
    %cst_15 = arith.constant 0.000000e+00 : f32
    %193 = vector.broadcast %cst_15 : f32 to vector<8x128xf32>
    %194 = arith.maximumf %192, %193 : vector<8x128xf32>
    %195 = vector.broadcast %32 : f32 to vector<8x128xf32>
    %196 = arith.addf %190, %195 : vector<8x128xf32>
    %cst_16 = arith.constant 0.000000e+00 : f32
    %197 = vector.broadcast %cst_16 : f32 to vector<8x128xf32>
    %198 = arith.maximumf %196, %197 : vector<8x128xf32>
    %199 = arith.addf %194, %198 : vector<8x128xf32>
    %200 = vector.broadcast %33 : f32 to vector<8x128xf32>
    %201 = arith.mulf %200, %125 : vector<8x128xf32>
    %202 = vector.broadcast %42 : f32 to vector<8x128xf32>
    %203 = arith.mulf %202, %124 : vector<8x128xf32>
    %204 = arith.subf %201, %203 : vector<8x128xf32>
    %205 = vector.broadcast %51 : f32 to vector<8x128xf32>
    %206 = arith.mulf %205, %120 : vector<8x128xf32>
    %207 = arith.addf %201, %206 : vector<8x128xf32>
    %208 = vector.broadcast %36 : f32 to vector<8x128xf32>
    %209 = arith.mulf %208, %162 : vector<8x128xf32>
    %210 = vector.broadcast %45 : f32 to vector<8x128xf32>
    %211 = arith.mulf %210, %161 : vector<8x128xf32>
    %212 = arith.subf %209, %211 : vector<8x128xf32>
    %213 = vector.broadcast %54 : f32 to vector<8x128xf32>
    %214 = arith.mulf %213, %157 : vector<8x128xf32>
    %215 = arith.addf %209, %214 : vector<8x128xf32>
    %216 = arith.addf %204, %212 : vector<8x128xf32>
    %217 = arith.addf %207, %215 : vector<8x128xf32>
    %218 = vector.broadcast %39 : f32 to vector<8x128xf32>
    %219 = arith.mulf %218, %199 : vector<8x128xf32>
    %220 = vector.broadcast %48 : f32 to vector<8x128xf32>
    %221 = arith.mulf %220, %198 : vector<8x128xf32>
    %222 = arith.subf %219, %221 : vector<8x128xf32>
    %223 = vector.broadcast %57 : f32 to vector<8x128xf32>
    %224 = arith.mulf %223, %194 : vector<8x128xf32>
    %225 = arith.addf %219, %224 : vector<8x128xf32>
    %226 = arith.addf %216, %222 : vector<8x128xf32>
    %227 = arith.addf %217, %225 : vector<8x128xf32>
    %228 = vector.broadcast %60 : f32 to vector<8x128xf32>
    %229 = arith.addf %226, %228 : vector<8x128xf32>
    %230 = vector.broadcast %63 : f32 to vector<8x128xf32>
    %231 = arith.addf %227, %230 : vector<8x128xf32>
    %cst_17 = arith.constant -0.00999999977 : f32
    %cst_18 = arith.constant 0.00999999977 : f32
    %232 = vector.broadcast %cst_17 : f32 to vector<8x128xf32>
    %233 = arith.maximumf %232, %229 : vector<8x128xf32>
    %234 = vector.broadcast %cst_18 : f32 to vector<8x128xf32>
    %235 = arith.minimumf %234, %233 : vector<8x128xf32>
    %236 = arith.subf %229, %235 : vector<8x128xf32>
    %c0_19 = arith.constant 0 : index
    %237 = arith.index_cast %67 : i32 to index
    %c0_20 = arith.constant 0 : index
    %238 = vector.load %arg4[%c0_19, %237, %c0_20] : memref<3x8x128xf32, #tpu.memory_space<vmem>>, vector<1x8x128xf32>
    %239 = vector.shape_cast %238 : vector<1x8x128xf32> to vector<8x128xf32>
    %240 = vector.shape_cast %236 : vector<8x128xf32> to vector<1x8x128xf32>
    tpu.vector_store %arg4[%c0_19, %237, %c0_20], %240 {strides = array<i32>} : memref<3x8x128xf32, #tpu.memory_space<vmem>>, vector<1x8x128xf32>,
    %cst_21 = arith.constant -0.00999999977 : f32
    %cst_22 = arith.constant 0.00999999977 : f32
    %241 = vector.broadcast %cst_21 : f32 to vector<8x128xf32>
    %242 = arith.maximumf %241, %231 : vector<8x128xf32>
    %243 = vector.broadcast %cst_22 : f32 to vector<8x128xf32>
    %244 = arith.minimumf %243, %242 : vector<8x128xf32>
    %245 = arith.subf %231, %244 : vector<8x128xf32>
    %c0_23 = arith.constant 0 : index
    %246 = arith.index_cast %67 : i32 to index
    %c0_24 = arith.constant 0 : index
    %247 = vector.load %arg5[%c0_23, %246, %c0_24] : memref<3x8x128xf32, #tpu.memory_space<vmem>>, vector<1x8x128xf32>
    %248 = vector.shape_cast %247 : vector<1x8x128xf32> to vector<8x128xf32>
    %249 = vector.shape_cast %245 : vector<8x128xf32> to vector<1x8x128xf32>
    tpu.vector_store %arg5[%c0_23, %246, %c0_24], %249 {strides = array<i32>} : memref<3x8x128xf32, #tpu.memory_space<vmem>>, vector<1x8x128xf32>,
    %250 = vector.broadcast %34 : f32 to vector<8x128xf32>
    %251 = arith.mulf %250, %125 : vector<8x128xf32>
    %252 = vector.broadcast %43 : f32 to vector<8x128xf32>
    %253 = arith.mulf %252, %124 : vector<8x128xf32>
    %254 = arith.subf %251, %253 : vector<8x128xf32>
    %255 = vector.broadcast %52 : f32 to vector<8x128xf32>
    %256 = arith.mulf %255, %120 : vector<8x128xf32>
    %257 = arith.addf %251, %256 : vector<8x128xf32>
    %258 = vector.broadcast %37 : f32 to vector<8x128xf32>
    %259 = arith.mulf %258, %162 : vector<8x128xf32>
    %260 = vector.broadcast %46 : f32 to vector<8x128xf32>
    %261 = arith.mulf %260, %161 : vector<8x128xf32>
    %262 = arith.subf %259, %261 : vector<8x128xf32>
    %263 = vector.broadcast %55 : f32 to vector<8x128xf32>
    %264 = arith.mulf %263, %157 : vector<8x128xf32>
    %265 = arith.addf %259, %264 : vector<8x128xf32>
    %266 = arith.addf %254, %262 : vector<8x128xf32>
    %267 = arith.addf %257, %265 : vector<8x128xf32>
    %268 = vector.broadcast %40 : f32 to vector<8x128xf32>
    %269 = arith.mulf %268, %199 : vector<8x128xf32>
    %270 = vector.broadcast %49 : f32 to vector<8x128xf32>
    %271 = arith.mulf %270, %198 : vector<8x128xf32>
    %272 = arith.subf %269, %271 : vector<8x128xf32>
    %273 = vector.broadcast %58 : f32 to vector<8x128xf32>
    %274 = arith.mulf %273, %194 : vector<8x128xf32>
    %275 = arith.addf %269, %274 : vector<8x128xf32>
    %276 = arith.addf %266, %272 : vector<8x128xf32>
    %277 = arith.addf %267, %275 : vector<8x128xf32>
    %278 = vector.broadcast %61 : f32 to vector<8x128xf32>
    %279 = arith.addf %276, %278 : vector<8x128xf32>
    %280 = vector.broadcast %64 : f32 to vector<8x128xf32>
    %281 = arith.addf %277, %280 : vector<8x128xf32>
    %cst_25 = arith.constant -0.00999999977 : f32
    %cst_26 = arith.constant 0.00999999977 : f32
    %282 = vector.broadcast %cst_25 : f32 to vector<8x128xf32>
    %283 = arith.maximumf %282, %279 : vector<8x128xf32>
    %284 = vector.broadcast %cst_26 : f32 to vector<8x128xf32>
    %285 = arith.minimumf %284, %283 : vector<8x128xf32>
    %286 = arith.subf %279, %285 : vector<8x128xf32>
    %c1_27 = arith.constant 1 : index
    %287 = arith.index_cast %67 : i32 to index
    %c0_28 = arith.constant 0 : index
    %288 = vector.load %arg4[%c1_27, %287, %c0_28] : memref<3x8x128xf32, #tpu.memory_space<vmem>>, vector<1x8x128xf32>
    %289 = vector.shape_cast %288 : vector<1x8x128xf32> to vector<8x128xf32>
    %290 = vector.shape_cast %286 : vector<8x128xf32> to vector<1x8x128xf32>
    tpu.vector_store %arg4[%c1_27, %287, %c0_28], %290 {strides = array<i32>} : memref<3x8x128xf32, #tpu.memory_space<vmem>>, vector<1x8x128xf32>,
    %cst_29 = arith.constant -0.00999999977 : f32
    %cst_30 = arith.constant 0.00999999977 : f32
    %291 = vector.broadcast %cst_29 : f32 to vector<8x128xf32>
    %292 = arith.maximumf %291, %281 : vector<8x128xf32>
    %293 = vector.broadcast %cst_30 : f32 to vector<8x128xf32>
    %294 = arith.minimumf %293, %292 : vector<8x128xf32>
    %295 = arith.subf %281, %294 : vector<8x128xf32>
    %c1_31 = arith.constant 1 : index
    %296 = arith.index_cast %67 : i32 to index
    %c0_32 = arith.constant 0 : index
    %297 = vector.load %arg5[%c1_31, %296, %c0_32] : memref<3x8x128xf32, #tpu.memory_space<vmem>>, vector<1x8x128xf32>
    %298 = vector.shape_cast %297 : vector<1x8x128xf32> to vector<8x128xf32>
    %299 = vector.shape_cast %295 : vector<8x128xf32> to vector<1x8x128xf32>
    tpu.vector_store %arg5[%c1_31, %296, %c0_32], %299 {strides = array<i32>} : memref<3x8x128xf32, #tpu.memory_space<vmem>>, vector<1x8x128xf32>,
    %300 = vector.broadcast %35 : f32 to vector<8x128xf32>
    %301 = arith.mulf %300, %125 : vector<8x128xf32>
    %302 = vector.broadcast %44 : f32 to vector<8x128xf32>
    %303 = arith.mulf %302, %124 : vector<8x128xf32>
    %304 = arith.subf %301, %303 : vector<8x128xf32>
    %305 = vector.broadcast %53 : f32 to vector<8x128xf32>
    %306 = arith.mulf %305, %120 : vector<8x128xf32>
    %307 = arith.addf %301, %306 : vector<8x128xf32>
    %308 = vector.broadcast %38 : f32 to vector<8x128xf32>
    %309 = arith.mulf %308, %162 : vector<8x128xf32>
    %310 = vector.broadcast %47 : f32 to vector<8x128xf32>
    %311 = arith.mulf %310, %161 : vector<8x128xf32>
    %312 = arith.subf %309, %311 : vector<8x128xf32>
    %313 = vector.broadcast %56 : f32 to vector<8x128xf32>
    %314 = arith.mulf %313, %157 : vector<8x128xf32>
    %315 = arith.addf %309, %314 : vector<8x128xf32>
    %316 = arith.addf %304, %312 : vector<8x128xf32>
    %317 = arith.addf %307, %315 : vector<8x128xf32>
    %318 = vector.broadcast %41 : f32 to vector<8x128xf32>
    %319 = arith.mulf %318, %199 : vector<8x128xf32>
    %320 = vector.broadcast %50 : f32 to vector<8x128xf32>
    %321 = arith.mulf %320, %198 : vector<8x128xf32>
    %322 = arith.subf %319, %321 : vector<8x128xf32>
    %323 = vector.broadcast %59 : f32 to vector<8x128xf32>
    %324 = arith.mulf %323, %194 : vector<8x128xf32>
    %325 = arith.addf %319, %324 : vector<8x128xf32>
    %326 = arith.addf %316, %322 : vector<8x128xf32>
    %327 = arith.addf %317, %325 : vector<8x128xf32>
    %328 = vector.broadcast %62 : f32 to vector<8x128xf32>
    %329 = arith.addf %326, %328 : vector<8x128xf32>
    %330 = vector.broadcast %65 : f32 to vector<8x128xf32>
    %331 = arith.addf %327, %330 : vector<8x128xf32>
    %cst_33 = arith.constant -0.00999999977 : f32
    %cst_34 = arith.constant 0.00999999977 : f32
    %332 = vector.broadcast %cst_33 : f32 to vector<8x128xf32>
    %333 = arith.maximumf %332, %329 : vector<8x128xf32>
    %334 = vector.broadcast %cst_34 : f32 to vector<8x128xf32>
    %335 = arith.minimumf %334, %333 : vector<8x128xf32>
    %336 = arith.subf %329, %335 : vector<8x128xf32>
    %c2_35 = arith.constant 2 : index
    %337 = arith.index_cast %67 : i32 to index
    %c0_36 = arith.constant 0 : index
    %338 = vector.load %arg4[%c2_35, %337, %c0_36] : memref<3x8x128xf32, #tpu.memory_space<vmem>>, vector<1x8x128xf32>
    %339 = vector.shape_cast %338 : vector<1x8x128xf32> to vector<8x128xf32>
    %340 = vector.shape_cast %336 : vector<8x128xf32> to vector<1x8x128xf32>
    tpu.vector_store %arg4[%c2_35, %337, %c0_36], %340 {strides = array<i32>} : memref<3x8x128xf32, #tpu.memory_space<vmem>>, vector<1x8x128xf32>,
    %cst_37 = arith.constant -0.00999999977 : f32
    %cst_38 = arith.constant 0.00999999977 : f32
    %341 = vector.broadcast %cst_37 : f32 to vector<8x128xf32>
    %342 = arith.maximumf %341, %331 : vector<8x128xf32>
    %343 = vector.broadcast %cst_38 : f32 to vector<8x128xf32>
    %344 = arith.minimumf %343, %342 : vector<8x128xf32>
    %345 = arith.subf %331, %344 : vector<8x128xf32>
    %c2_39 = arith.constant 2 : index
    %346 = arith.index_cast %67 : i32 to index
    %c0_40 = arith.constant 0 : index
    %347 = vector.load %arg5[%c2_39, %346, %c0_40] : memref<3x8x128xf32, #tpu.memory_space<vmem>>, vector<1x8x128xf32>
    %348 = vector.shape_cast %347 : vector<1x8x128xf32> to vector<8x128xf32>
    %349 = vector.shape_cast %345 : vector<8x128xf32> to vector<1x8x128xf32>
    tpu.vector_store %arg5[%c2_39, %346, %c0_40], %349 {strides = array<i32>} : memref<3x8x128xf32, #tpu.memory_space<vmem>>, vector<1x8x128xf32>,
    %c1_i32 = arith.constant 1 : i32
    return
  }
  func.func @transform_0(%arg0: i32) -> i32 {
    %c0_i32 = arith.constant 0 : i32
    %c0_i32_0 = arith.constant 0 : i32
    return %c0_i32 : i32
  }
  func.func @transform_1(%arg0: i32) -> (i32, i32, i32) {
    %c0_i32 = arith.constant 0 : i32
    %c0_i32_0 = arith.constant 0 : i32
    %c0_i32_1 = arith.constant 0 : i32
    return %c0_i32, %arg0, %c0_i32_0 : i32, i32, i32
  }
  func.func @transform_2(%arg0: i32) -> (i32, i32, i32) {
    %c0_i32 = arith.constant 0 : i32
    %c0_i32_0 = arith.constant 0 : i32
    %c0_i32_1 = arith.constant 0 : i32
    return %c0_i32, %arg0, %c0_i32_0 : i32, i32, i32
  }
  func.func @transform_3(%arg0: i32) -> (i32, i32, i32) {
    %c0_i32 = arith.constant 0 : i32
    %c0_i32_0 = arith.constant 0 : i32
    %c0_i32_1 = arith.constant 0 : i32
    return %c0_i32, %arg0, %c0_i32_0 : i32, i32, i32
  }
  func.func @transform_4(%arg0: i32) -> (i32, i32, i32) {
    %c0_i32 = arith.constant 0 : i32
    %c0_i32_0 = arith.constant 0 : i32
    %c0_i32_1 = arith.constant 0 : i32
    return %c0_i32, %arg0, %c0_i32_0 : i32, i32, i32
  }
}

</mosaic_0001>

<llo_original>
// kernel: tpu_custom_call.1
$region0: #{tpu_custom_call.1}
  #allocation0 [shape = 'u32[]', space=smem, size = 0x4, offset = 0x4, fixed_abs, tag = 'smem constant byte address 0x4 - core index']
  #allocation1 [shape = 'u32[144,128]{1,0:T(1,128)}', space=vmem, size = 0x12000, scoped, tag = 'internal scratch']
  %s0 = inlined_call_operand.hbm [shape: f32[66], index: 0, kind: input, shape index: {}]
  %s1 = inlined_call_operand.hbm [shape: f32[3,16,128], index: 1, kind: input, shape index: {}]
  %s2 = inlined_call_operand.hbm [shape: f32[3,16,128], index: 2, kind: input, shape index: {}]
  %s3 = inlined_call_operand.hbm [shape: f32[3,16,128], index: 3, kind: output, shape index: {0}]
  %s4 = inlined_call_operand.hbm [shape: f32[3,16,128], index: 4, kind: output, shape index: {1}]
  %5 = xla_tuple %s3, %s4
  %s6 = sld [smem:[#allocation0]]
  $region65: #{tpu_custom_call.1} parent=0
    _
  %s8 = ssub.s32 1, %s6
  %s9 = scalar_select 0, %s8, %s6
  $region1: #{tpu_custom_call.1} parent=0
    #allocation2 [shape = 'u8[512]{0}', space=smem, size = 0x200, scoped, tag = 'input window, operand 0, single buffered']
    #allocation3 [shape = 's32[2]{0}', space=sflag, size = 0x8, scoped, tag = 'scoped memory for tpu_custom_call.1']
    #allocation4 [shape = 's32[2]{0}', space=sflag, size = 0x8, scoped, tag = 'scoped memory for tpu_custom_call.1']
    #allocation5 [shape = 's32[2]{0}', space=sflag, size = 0x8, scoped, tag = 'scoped memory for tpu_custom_call.1']
    #allocation6 [shape = 'u8[24576]{0}', space=vmem, size = 0x6000, scoped, tag = 'input window, operand 1']
    #allocation7 [shape = 'u8[24576]{0}', space=vmem, size = 0x6000, scoped, tag = 'input window, operand 2']
    #allocation8 [shape = 's32[2]{0}', space=sflag, size = 0x8, scoped, tag = 'scoped memory for tpu_custom_call.1']
    #allocation9 [shape = 'u8[24576]{0}', space=vmem, size = 0x6000, scoped, tag = 'output window, operand 0']
    #allocation10 [shape = 'u8[24576]{0}', space=vmem, size = 0x6000, scoped, tag = 'output window, operand 1']
    #allocation11 [shape = 's32[2]{0}', space=sflag, size = 0x8, scoped, tag = 'scoped memory for tpu_custom_call.1']
    %10 = vsyncpa [#allocation5], 0
    %11 = vsyncpa [#allocation3], 0
    %s12 = scalar_lea.sflag [#allocation3], 1
    %13 = vsyncpa %s12, 0
    %14 = vsyncpa [#allocation8], 0
    %s15 = scalar_lea.sflag [#allocation8], 1
    %16 = vsyncpa %s15, 0
    %17 = vsyncpa [#allocation4], 0
    %s18 = scalar_lea.sflag [#allocation4], 1
    %19 = vsyncpa %s18, 0
    %20 = vsyncpa [#allocation11], 0
    %s21 = scalar_lea.sflag [#allocation11], 1
    %22 = vsyncpa %s21, 0
    loop: start=0, step=1, limit=4
    $region2: #{tpu_custom_call.1} parent=1 // loop_pre_header
      _
    $region3: #{tpu_custom_call.1} parent=1 // loop_header
      %s24 = sphi 0, %s28
      %p25 = scmp.ge.s32.totalorder %s24, 4
      %s32 = sphi 0, %s32
      %s34 = sphi 0, %s32
      %s35 = sphi 0, %s34
      %s49 = sphi 0, %s35
      %s55 = sphi 0, %s57
      %s58 = sphi 0, %s55
      %s59 = sphi 0, %s58
      %s75 = sphi 0, %s59
      %s81 = sphi 0, %s83
      %s84 = sphi 0, %s81
      %s85 = sphi 0, %s84
      %s101 = sphi 0, %s85
      %s107 = sphi 0, %s109
      %s110 = sphi 0, %s107
      %s111 = sphi 0, %s110
      %s127 = sphi 0, %s111
      %s133 = sphi 0, %s135
      %s136 = sphi 0, %s133
      %s137 = sphi 0, %s136
      %s153 = sphi 0, %s137
    $region4: #{tpu_custom_call.1} parent=1 // loop_header_branch
      %27 = sbr.rel (%p25) target = $region8
    $region5: #{tpu_custom_call.1} parent=1 // loop_body
      %s29 = ssub.s32 %s24, 1
      %s30 = ssub.s32 %s24, 2
      %s31 = sadd.s32 %s24, 1
      %s33 = sadd.s32 %s32, 1
      %p36 = scmp.eq.s32.totalorder %s24, 1
      %p37 = scmp.ne.s32.totalorder %s32, %s34
      %p38 = scmp.eq.s32.totalorder %s24, 0
      %p39 = por %p37, %p38
      %p40 = scmp.ne.s32.totalorder %s32, %s34
      %p41 = scmp.eq.s32.totalorder %s29, 1
      %p42 = por %p40, %p41
      %p43 = scmp.ne.s32.totalorder %s34, %s35
      %p44 = scmp.eq.s32.totalorder %s29, 0
      %p45 = por %p43, %p44
      %p46 = scmp.ne.s32.totalorder %s34, %s35
      %p47 = scmp.eq.s32.totalorder %s30, 1
      %p48 = por %p46, %p47
      %p50 = scmp.ne.s32.totalorder %s35, %s49
      %p51 = scmp.eq.s32.totalorder %s30, 0
      %p52 = por %p50, %p51
      %s53 = ssub.s32 %s24, %s31
      %p54 = scmp.eq.s32.totalorder %s53, 0
      %s56 = sadd.s32 %s55, 1
      %s57 = scalar_select %p54, %s55, %s56
      %p60 = pneg %p54
      %p61 = scmp.eq.s32.totalorder %s24, 1
      %p62 = por %p60, %p61
      %p63 = scmp.ne.s32.totalorder %s55, %s58
      %p64 = scmp.eq.s32.totalorder %s24, 0
      %p65 = por %p63, %p64
      %p66 = scmp.ne.s32.totalorder %s55, %s58
      %p67 = scmp.eq.s32.totalorder %s29, 1
      %p68 = por %p66, %p67
      %p69 = scmp.ne.s32.totalorder %s58, %s59
      %p70 = scmp.eq.s32.totalorder %s29, 0
      %p71 = por %p69, %p70
      %p72 = scmp.ne.s32.totalorder %s58, %s59
      %p73 = scmp.eq.s32.totalorder %s30, 1
      %p74 = por %p72, %p73
      %p76 = scmp.ne.s32.totalorder %s59, %s75
      %p77 = scmp.eq.s32.totalorder %s30, 0
      %p78 = por %p76, %p77
      %s79 = ssub.s32 %s24, %s31
      %p80 = scmp.eq.s32.totalorder %s79, 0
      %s82 = sadd.s32 %s81, 1
      %s83 = scalar_select %p80, %s81, %s82
      %p86 = pneg %p80
      %p87 = scmp.eq.s32.totalorder %s24, 1
      %p88 = por %p86, %p87
      %p89 = scmp.ne.s32.totalorder %s81, %s84
      %p90 = scmp.eq.s32.totalorder %s24, 0
      %p91 = por %p89, %p90
      %p92 = scmp.ne.s32.totalorder %s81, %s84
      %p93 = scmp.eq.s32.totalorder %s29, 1
      %p94 = por %p92, %p93
      %p95 = scmp.ne.s32.totalorder %s84, %s85
      %p96 = scmp.eq.s32.totalorder %s29, 0
      %p97 = por %p95, %p96
      %p98 = scmp.ne.s32.totalorder %s84, %s85
      %p99 = scmp.eq.s32.totalorder %s30, 1
      %p100 = por %p98, %p99
      %p102 = scmp.ne.s32.totalorder %s85, %s101
      %p103 = scmp.eq.s32.totalorder %s30, 0
      %p104 = por %p102, %p103
      %s105 = ssub.s32 %s24, %s31
      %p106 = scmp.eq.s32.totalorder %s105, 0
      %s108 = sadd.s32 %s107, 1
      %s109 = scalar_select %p106, %s107, %s108
      %p112 = pneg %p106
      %p113 = scmp.eq.s32.totalorder %s24, 1
      %p114 = por %p112, %p113
      %p115 = scmp.ne.s32.totalorder %s107, %s110
      %p116 = scmp.eq.s32.totalorder %s24, 0
      %p117 = por %p115, %p116
      %p118 = scmp.ne.s32.totalorder %s107, %s110
      %p119 = scmp.eq.s32.totalorder %s29, 1
      %p120 = por %p118, %p119
      %p121 = scmp.ne.s32.totalorder %s110, %s111
      %p122 = scmp.eq.s32.totalorder %s29, 0
      %p123 = por %p121, %p122
      %p124 = scmp.ne.s32.totalorder %s110, %s111
      %p125 = scmp.eq.s32.totalorder %s30, 1
      %p126 = por %p124, %p125
      %p128 = scmp.ne.s32.totalorder %s111, %s127
      %p129 = scmp.eq.s32.totalorder %s30, 0
      %p130 = por %p128, %p129
      %s131 = ssub.s32 %s24, %s31
      %p132 = scmp.eq.s32.totalorder %s131, 0
      %s134 = sadd.s32 %s133, 1
      %s135 = scalar_select %p132, %s133, %s134
      %p138 = pneg %p132
      %p139 = scmp.eq.s32.totalorder %s24, 1
      %p140 = por %p138, %p139
      %p141 = scmp.ne.s32.totalorder %s133, %s136
      %p142 = scmp.eq.s32.totalorder %s24, 0
      %p143 = por %p141, %p142
      %p144 = scmp.ne.s32.totalorder %s133, %s136
      %p145 = scmp.eq.s32.totalorder %s29, 1
      %p146 = por %p144, %p145
      %p147 = scmp.ne.s32.totalorder %s136, %s137
      %p148 = scmp.eq.s32.totalorder %s29, 0
      %p149 = por %p147, %p148
      %p150 = scmp.ne.s32.totalorder %s136, %s137
      %p151 = scmp.eq.s32.totalorder %s30, 1
      %p152 = por %p150, %p151
      %p154 = scmp.ne.s32.totalorder %s137, %s153
      %p155 = scmp.eq.s32.totalorder %s30, 0
      %p156 = por %p154, %p155
      %p157 = scmp.le.s32.totalorder 1, %s24
      %p158 = scmp.lt.s32.totalorder %s24, 3
      %p159 = pnand %p157, %p158
      %p160 = pneg %p159
      // Predicated region
      $region9: #{tpu_custom_call.1} parent=5 // pred_check
        _
      $region10: #{tpu_custom_call.1} parent=5 // pred_check_branch
        %162 = sbr.rel (%p159) target = $region12
      $region11: #{tpu_custom_call.1} parent=5 // pred_region
        %s163 = ssub.s32 %s24, 1
        // Predicated region
        $region13: #{tpu_custom_call.1} parent=11 // pred_check
          %p164 = pneg %p45
        $region14: #{tpu_custom_call.1} parent=11 // pred_check_branch
          %166 = sbr.rel (%p164) target = $region16
        $region15: #{tpu_custom_call.1} parent=11 // pred_region
          %s168 = ssub.s32 16, 16
          %169 = vsyncadd [#allocation5], %s168
          %172 = dma.hbm_to_smem %s0, 16, [#allocation2], [#allocation5]
        $region16: #{tpu_custom_call.1} parent=11 // pred_fallthru
          _
      $region12: #{tpu_custom_call.1} parent=5 // pred_fallthru
        _
      %p173 = scmp.lt.s32.totalorder %s24, 2
      // Predicated region
      $region17: #{tpu_custom_call.1} parent=5 // pred_check
        %p174 = pneg %p173
      $region18: #{tpu_custom_call.1} parent=5 // pred_check_branch
        %176 = sbr.rel (%p174) target = $region20
      $region19: #{tpu_custom_call.1} parent=5 // pred_region
        // Predicated region
        $region21: #{tpu_custom_call.1} parent=19 // pred_check
          %p177 = pneg %p65
        $region22: #{tpu_custom_call.1} parent=19 // pred_check_branch
          %179 = sbr.rel (%p177) target = $region24
        $region23: #{tpu_custom_call.1} parent=19 // pred_region
          %s180 = sand.u32 %s55, 1
          %s181 = scalar_lea.sflag [#allocation3], %s180
          %s182 = sand.u32 %s55, 1
          %s183 = smul.addr %s182, 24
          %s184 = scalar_lea.vmem [#allocation6], %s183
          %s186 = ssub.s32 384, 384
          %187 = vsyncadd %s181, %s186
          %s188 = smul.addr %s24, 128
          %s189 = scalar_lea.hbm %s1, %s188
          %s190 = sshll.u32 %s184, 4
          %s191 = int_to_ptr.vmem [resolvable:$true] %s190
          %196 = dma.hbm_to_vmem [thread:$0]  %s189, 384, %s191, %s181, 256, 128, 8
        $region24: #{tpu_custom_call.1} parent=19 // pred_fallthru
          _
        // Predicated region
        $region25: #{tpu_custom_call.1} parent=19 // pred_check
          %p197 = pneg %p91
        $region26: #{tpu_custom_call.1} parent=19 // pred_check_branch
          %199 = sbr.rel (%p197) target = $region28
        $region27: #{tpu_custom_call.1} parent=19 // pred_region
          %s200 = sand.u32 %s81, 1
          %s201 = scalar_lea.sflag [#allocation8], %s200
          %s202 = sand.u32 %s81, 1
          %s203 = smul.addr %s202, 24
          %s204 = scalar_lea.vmem [#allocation7], %s203
          %s206 = ssub.s32 384, 384
          %207 = vsyncadd %s201, %s206
          %s208 = smul.addr %s24, 128
          %s209 = scalar_lea.hbm %s2, %s208
          %s210 = sshll.u32 %s204, 4
          %s211 = int_to_ptr.vmem [resolvable:$true] %s210
          %216 = dma.hbm_to_vmem [thread:$0]  %s209, 384, %s211, %s201, 256, 128, 8
        $region28: #{tpu_custom_call.1} parent=19 // pred_fallthru
          _
      $region20: #{tpu_custom_call.1} parent=5 // pred_fallthru
        _
      %p217 = scmp.le.s32.totalorder 1, %s24
      %p218 = scmp.lt.s32.totalorder %s24, 3
      %p219 = pnand %p217, %p218
      %p220 = pneg %p219
      // Predicated region
      $region29: #{tpu_custom_call.1} parent=5 // pred_check
        _
      $region30: #{tpu_custom_call.1} parent=5 // pred_check_branch
        %222 = sbr.rel (%p219) target = $region32
      $region31: #{tpu_custom_call.1} parent=5 // pred_region
        %s223 = ssub.s32 %s24, 1
        // Predicated region
        $region33: #{tpu_custom_call.1} parent=31 // pred_check
          %p224 = pneg %p45
        $region34: #{tpu_custom_call.1} parent=31 // pred_check_branch
          %226 = sbr.rel (%p224) target = $region36
        $region35: #{tpu_custom_call.1} parent=31 // pred_region
          %227 = dma.done [#allocation5], 16
        $region36: #{tpu_custom_call.1} parent=31 // pred_fallthru
          _
        %s228 = sand.u32 %s58, 1
        %s229 = scalar_lea.sflag [#allocation3], %s228
        %s230 = sand.u32 %s58, 1
        %s231 = smul.addr %s230, 24
        %s232 = scalar_lea.vmem [#allocation6], %s231
        // Predicated region
        $region37: #{tpu_custom_call.1} parent=31 // pred_check
          %p233 = pneg %p71
        $region38: #{tpu_custom_call.1} parent=31 // pred_check_branch
          %235 = sbr.rel (%p233) target = $region40
        $region39: #{tpu_custom_call.1} parent=31 // pred_region
          %236 = dma.done %s229, 384
        $region40: #{tpu_custom_call.1} parent=31 // pred_fallthru
          _
        %s237 = sand.u32 %s84, 1
        %s238 = scalar_lea.sflag [#allocation8], %s237
        %s239 = sand.u32 %s84, 1
        %s240 = smul.addr %s239, 24
        %s241 = scalar_lea.vmem [#allocation7], %s240
        // Predicated region
        $region41: #{tpu_custom_call.1} parent=31 // pred_check
          %p242 = pneg %p97
        $region42: #{tpu_custom_call.1} parent=31 // pred_check_branch
          %244 = sbr.rel (%p242) target = $region44
        $region43: #{tpu_custom_call.1} parent=31 // pred_region
          %245 = dma.done %s238, 384
        $region44: #{tpu_custom_call.1} parent=31 // pred_fallthru
          _
        %246 = sfence
        %p247 = pneg %p45
        %p248 = pneg %p42
        %s249 = sand.u32 %s58, 1
        %s250 = scalar_lea.sflag [#allocation3], %s249
        %s251 = sand.u32 %s58, 1
        %s252 = smul.addr %s251, 24
        %s253 = scalar_lea.vmem [#allocation6], %s252
        %p254 = pneg %p71
        %p255 = pneg %p68
        %s256 = sand.u32 %s84, 1
        %s257 = scalar_lea.sflag [#allocation8], %s256
        %s258 = sand.u32 %s84, 1
        %s259 = smul.addr %s258, 24
        %s260 = scalar_lea.vmem [#allocation7], %s259
        %p261 = pneg %p97
        %p262 = pneg %p94
        %p263 = pneg %p123
        %p264 = pneg %p120
        %s265 = sand.u32 %s110, 1
        %s266 = scalar_lea.sflag [#allocation4], %s265
        %s267 = sand.u32 %s110, 1
        %s268 = smul.addr %s267, 24
        %s269 = scalar_lea.vmem [#allocation9], %s268
        %p270 = pneg %p149
        %p271 = pneg %p146
        %s272 = sand.u32 %s136, 1
        %s273 = scalar_lea.sflag [#allocation11], %s272
        %s274 = sand.u32 %s136, 1
        %s275 = smul.addr %s274, 24
        %s276 = scalar_lea.vmem [#allocation10], %s275
        %s277 = sld [smem:[#allocation2]]
        %s278 = sld [smem:[#allocation2 + $0x1]]
        %s279 = sld [smem:[#allocation2 + $0x2]]
        %s280 = sld [smem:[#allocation2 + $0x3]]
        %s281 = sld [smem:[#allocation2 + $0x4]]
        %s282 = sld [smem:[#allocation2 + $0x5]]
        %s283 = sld [smem:[#allocation2 + $0x6]]
        %s284 = sld [smem:[#allocation2 + $0x7]]
        %s285 = sld [smem:[#allocation2 + $0x8]]
        %s286 = sld [smem:[#allocation2 + $0x9]]
        %s287 = sld [smem:[#allocation2 + $0xa]]
        %s288 = sld [smem:[#allocation2 + $0xb]]
        %s289 = sld [smem:[#allocation2 + $0xc]]
        %s290 = sld [smem:[#allocation2 + $0xd]]
        %s291 = sld [smem:[#allocation2 + $0xe]]
        %s292 = sld [smem:[#allocation2 + $0xf]]
        %s293 = sld [smem:[#allocation2 + $0x10]]
        %s294 = sld [smem:[#allocation2 + $0x11]]
        %s295 = sld [smem:[#allocation2 + $0x12]]
        %s296 = sld [smem:[#allocation2 + $0x13]]
        %s297 = sld [smem:[#allocation2 + $0x14]]
        %s298 = sld [smem:[#allocation2 + $0x15]]
        %s299 = sld [smem:[#allocation2 + $0x16]]
        %s300 = sld [smem:[#allocation2 + $0x17]]
        %s301 = sld [smem:[#allocation2 + $0x18]]
        %s302 = sld [smem:[#allocation2 + $0x19]]
        %s303 = sld [smem:[#allocation2 + $0x1a]]
        %s304 = sld [smem:[#allocation2 + $0x1b]]
        %s305 = sld [smem:[#allocation2 + $0x1c]]
        %s306 = sld [smem:[#allocation2 + $0x1d]]
        %s307 = sld [smem:[#allocation2 + $0x1e]]
        %s308 = sld [smem:[#allocation2 + $0x1f]]
        %s309 = sld [smem:[#allocation2 + $0x20]]
        %s310 = sld [smem:[#allocation2 + $0x21]]
        %s311 = sld [smem:[#allocation2 + $0x22]]
        %s312 = sld [smem:[#allocation2 + $0x23]]
        %s313 = sld [smem:[#allocation2 + $0x24]]
        %s314 = sld [smem:[#allocation2 + $0x25]]
        %s315 = sld [smem:[#allocation2 + $0x26]]
        %s316 = sld [smem:[#allocation2 + $0x27]]
        %s317 = sld [smem:[#allocation2 + $0x28]]
        %s318 = sld [smem:[#allocation2 + $0x29]]
        %s319 = sld [smem:[#allocation2 + $0x2a]]
        %s320 = sld [smem:[#allocation2 + $0x2b]]
        %s321 = sld [smem:[#allocation2 + $0x2c]]
        %s322 = sld [smem:[#allocation2 + $0x2d]]
        %s323 = sld [smem:[#allocation2 + $0x2e]]
        %s324 = sld [smem:[#allocation2 + $0x2f]]
        %s325 = sld [smem:[#allocation2 + $0x30]]
        %s326 = sld [smem:[#allocation2 + $0x31]]
        %s327 = sld [smem:[#allocation2 + $0x32]]
        %s328 = sld [smem:[#allocation2 + $0x33]]
        %s329 = sld [smem:[#allocation2 + $0x34]]
        %s330 = sld [smem:[#allocation2 + $0x35]]
        %s331 = sld [smem:[#allocation2 + $0x36]]
        %s332 = sld [smem:[#allocation2 + $0x37]]
        %s333 = sld [smem:[#allocation2 + $0x38]]
        %s334 = sld [smem:[#allocation2 + $0x39]]
        %s335 = sld [smem:[#allocation2 + $0x3a]]
        %s336 = sld [smem:[#allocation2 + $0x3b]]
        %s337 = sld [smem:[#allocation2 + $0x3c]]
        %s338 = sld [smem:[#allocation2 + $0x3d]]
        %s339 = sld [smem:[#allocation2 + $0x3e]]
        %s340 = sld [smem:[#allocation2 + $0x3f]]
        %s341 = sld [smem:[#allocation2 + $0x40]]
        %s342 = sld [smem:[#allocation2 + $0x41]]
        %v343 = vld [vmem:[%s232] sm:$0xff]
        %v344 = vld [vmem:[%s241] sm:$0xff]
        %v345 = vadd.f32 %v343, %v344
        %s346 = sadd.s32 0, 8
        %s347 = scalar_lea.vmem %s232, %s346 [#allocation6]
        %v348 = vld [vmem:[%s347] sm:$0xff]
        %s349 = scalar_lea.vmem %s241, %s346 [#allocation7]
        %v350 = vld [vmem:[%s349] sm:$0xff]
        %v351 = vadd.f32 %v348, %v350
        %s352 = sadd.s32 0, 16
        %s353 = scalar_lea.vmem %s232, %s352 [#allocation6]
        %v354 = vld [vmem:[%s353] sm:$0xff]
        %s355 = scalar_lea.vmem %s241, %s352 [#allocation7]
        %v356 = vld [vmem:[%s355] sm:$0xff]
        %v357 = vadd.f32 %v354, %v356
        %v358 = vstv %s277
        %v359 = vmul.f32 %v358, %v345
        %v360 = vstv %s286
        %v361 = vmul.f32 %v360, %v344
        %v362 = vsub.f32 %v359, %v361
        %v363 = vstv %s295
        %v364 = vmul.f32 %v363, %v343
        %v365 = vadd.f32 %v359, %v364
        %v366 = vstv %s280
        %v367 = vmul.f32 %v366, %v351
        %v368 = vstv %s289
        %v369 = vmul.f32 %v368, %v350
        %v370 = vsub.f32 %v367, %v369
        %v371 = vstv %s298
        %v372 = vmul.f32 %v371, %v348
        %v373 = vadd.f32 %v367, %v372
        %v374 = vadd.f32 %v362, %v370
        %v375 = vadd.f32 %v365, %v373
        %v376 = vstv %s283
        %v377 = vmul.f32 %v376, %v357
        %v378 = vstv %s292
        %v379 = vmul.f32 %v378, %v356
        %v380 = vsub.f32 %v377, %v379
        %v381 = vstv %s301
        %v382 = vmul.f32 %v381, %v354
        %v383 = vadd.f32 %v377, %v382
        %v384 = vadd.f32 %v374, %v380
        %v385 = vadd.f32 %v375, %v383
        %v386 = vstv %s304
        %v387 = vadd.f32 %v384, %v386
        %v388 = vmax.f32 %v387, 0.0
        %v389 = vstv %s307
        %v390 = vadd.f32 %v385, %v389
        %v391 = vmax.f32 %v390, 0.0
        %v392 = vadd.f32 %v388, %v391
        %v393 = vstv %s278
        %v394 = vmul.f32 %v393, %v345
        %v395 = vstv %s287
        %v396 = vmul.f32 %v395, %v344
        %v397 = vsub.f32 %v394, %v396
        %v398 = vstv %s296
        %v399 = vmul.f32 %v398, %v343
        %v400 = vadd.f32 %v394, %v399
        %v401 = vstv %s281
        %v402 = vmul.f32 %v401, %v351
        %v403 = vstv %s290
        %v404 = vmul.f32 %v403, %v350
        %v405 = vsub.f32 %v402, %v404
        %v406 = vstv %s299
        %v407 = vmul.f32 %v406, %v348
        %v408 = vadd.f32 %v402, %v407
        %v409 = vadd.f32 %v397, %v405
        %v410 = vadd.f32 %v400, %v408
        %v411 = vstv %s284
        %v412 = vmul.f32 %v411, %v357
        %v413 = vstv %s293
        %v414 = vmul.f32 %v413, %v356
        %v415 = vsub.f32 %v412, %v414
        %v416 = vstv %s302
        %v417 = vmul.f32 %v416, %v354
        %v418 = vadd.f32 %v412, %v417
        %v419 = vadd.f32 %v409, %v415
        %v420 = vadd.f32 %v410, %v418
        %v421 = vstv %s305
        %v422 = vadd.f32 %v419, %v421
        %v423 = vmax.f32 %v422, 0.0
        %v424 = vstv %s308
        %v425 = vadd.f32 %v420, %v424
        %v426 = vmax.f32 %v425, 0.0
        %v427 = vadd.f32 %v423, %v426
        %v428 = vstv %s279
        %v429 = vmul.f32 %v428, %v345
        %v430 = vstv %s288
        %v431 = vmul.f32 %v430, %v344
        %v432 = vsub.f32 %v429, %v431
        %v433 = vstv %s297
        %v434 = vmul.f32 %v433, %v343
        %v435 = vadd.f32 %v429, %v434
        %v436 = vstv %s282
        %v437 = vmul.f32 %v436, %v351
        %v438 = vstv %s291
        %v439 = vmul.f32 %v438, %v350
        %v440 = vsub.f32 %v437, %v439
        %v441 = vstv %s300
        %v442 = vmul.f32 %v441, %v348
        %v443 = vadd.f32 %v437, %v442
        %v444 = vadd.f32 %v432, %v440
        %v445 = vadd.f32 %v435, %v443
        %v446 = vstv %s285
        %v447 = vmul.f32 %v446, %v357
        %v448 = vstv %s294
        %v449 = vmul.f32 %v448, %v356
        %v450 = vsub.f32 %v447, %v449
        %v451 = vstv %s303
        %v452 = vmul.f32 %v451, %v354
        %v453 = vadd.f32 %v447, %v452
        %v454 = vadd.f32 %v444, %v450
        %v455 = vadd.f32 %v445, %v453
        %v456 = vstv %s306
        %v457 = vadd.f32 %v454, %v456
        %v458 = vmax.f32 %v457, 0.0
        %v459 = vstv %s309
        %v460 = vadd.f32 %v455, %v459
        %v461 = vmax.f32 %v460, 0.0
        %v462 = vadd.f32 %v458, %v461
        %v463 = vstv %s310
        %v464 = vmul.f32 %v463, %v392
        %v465 = vstv %s319
        %v466 = vmul.f32 %v465, %v391
        %v467 = vsub.f32 %v464, %v466
        %v468 = vstv %s328
        %v469 = vmul.f32 %v468, %v388
        %v470 = vadd.f32 %v464, %v469
        %v471 = vstv %s313
        %v472 = vmul.f32 %v471, %v427
        %v473 = vstv %s322
        %v474 = vmul.f32 %v473, %v426
        %v475 = vsub.f32 %v472, %v474
        %v476 = vstv %s331
        %v477 = vmul.f32 %v476, %v423
        %v478 = vadd.f32 %v472, %v477
        %v479 = vadd.f32 %v467, %v475
        %v480 = vadd.f32 %v470, %v478
        %v481 = vstv %s316
        %v482 = vmul.f32 %v481, %v462
        %v483 = vstv %s325
        %v484 = vmul.f32 %v483, %v461
        %v485 = vsub.f32 %v482, %v484
        %v486 = vstv %s334
        %v487 = vmul.f32 %v486, %v458
        %v488 = vadd.f32 %v482, %v487
        %v489 = vadd.f32 %v479, %v485
        %v490 = vadd.f32 %v480, %v488
        %v491 = vstv %s337
        %v492 = vadd.f32 %v489, %v491
        %v493 = vstv %s340
        %v494 = vadd.f32 %v490, %v493
        %v495 = vmax.f32 %v492, -0.01
        %v496 = vmin.f32 %v495, 0.01
        %v497 = vsub.f32 %v492, %v496
        %498 = vst [vmem:[%s269] sm:$0xff] %v497
        %v499 = vmax.f32 %v494, -0.01
        %v500 = vmin.f32 %v499, 0.01
        %v501 = vsub.f32 %v494, %v500
        %502 = vst [vmem:[%s276] sm:$0xff] %v501
        %v503 = vstv %s311
        %v504 = vmul.f32 %v503, %v392
        %v505 = vstv %s320
        %v506 = vmul.f32 %v505, %v391
        %v507 = vsub.f32 %v504, %v506
        %v508 = vstv %s329
        %v509 = vmul.f32 %v508, %v388
        %v510 = vadd.f32 %v504, %v509
        %v511 = vstv %s314
        %v512 = vmul.f32 %v511, %v427
        %v513 = vstv %s323
        %v514 = vmul.f32 %v513, %v426
        %v515 = vsub.f32 %v512, %v514
        %v516 = vstv %s332
        %v517 = vmul.f32 %v516, %v423
        %v518 = vadd.f32 %v512, %v517
        %v519 = vadd.f32 %v507, %v515
        %v520 = vadd.f32 %v510, %v518
        %v521 = vstv %s317
        %v522 = vmul.f32 %v521, %v462
        %v523 = vstv %s326
        %v524 = vmul.f32 %v523, %v461
        %v525 = vsub.f32 %v522, %v524
        %v526 = vstv %s335
        %v527 = vmul.f32 %v526, %v458
        %v528 = vadd.f32 %v522, %v527
        %v529 = vadd.f32 %v519, %v525
        %v530 = vadd.f32 %v520, %v528
        %v531 = vstv %s338
        %v532 = vadd.f32 %v529, %v531
        %v533 = vstv %s341
        %v534 = vadd.f32 %v530, %v533
        %v535 = vmax.f32 %v532, -0.01
        %v536 = vmin.f32 %v535, 0.01
        %v537 = vsub.f32 %v532, %v536
        %s538 = scalar_lea.vmem %s269, %s346 [#allocation9]
        %539 = vst [vmem:[%s538] sm:$0xff] %v537
        %v540 = vmax.f32 %v534, -0.01
        %v541 = vmin.f32 %v540, 0.01
        %v542 = vsub.f32 %v534, %v541
        %s543 = scalar_lea.vmem %s276, %s346 [#allocation10]
        %544 = vst [vmem:[%s543] sm:$0xff] %v542
        %v545 = vstv %s312
        %v546 = vmul.f32 %v545, %v392
        %v547 = vstv %s321
        %v548 = vmul.f32 %v547, %v391
        %v549 = vsub.f32 %v546, %v548
        %v550 = vstv %s330
        %v551 = vmul.f32 %v550, %v388
        %v552 = vadd.f32 %v546, %v551
        %v553 = vstv %s315
        %v554 = vmul.f32 %v553, %v427
        %v555 = vstv %s324
        %v556 = vmul.f32 %v555, %v426
        %v557 = vsub.f32 %v554, %v556
        %v558 = vstv %s333
        %v559 = vmul.f32 %v558, %v423
        %v560 = vadd.f32 %v554, %v559
        %v561 = vadd.f32 %v549, %v557
        %v562 = vadd.f32 %v552, %v560
        %v563 = vstv %s318
        %v564 = vmul.f32 %v563, %v462
        %v565 = vstv %s327
        %v566 = vmul.f32 %v565, %v461
        %v567 = vsub.f32 %v564, %v566
        %v568 = vstv %s336
        %v569 = vmul.f32 %v568, %v458
        %v570 = vadd.f32 %v564, %v569
        %v571 = vadd.f32 %v561, %v567
        %v572 = vadd.f32 %v562, %v570
        %v573 = vstv %s339
        %v574 = vadd.f32 %v571, %v573
        %v575 = vstv %s342
        %v576 = vadd.f32 %v572, %v575
        %v577 = vmax.f32 %v574, -0.01
        %v578 = vmin.f32 %v577, 0.01
        %v579 = vsub.f32 %v574, %v578
        %s580 = scalar_lea.vmem %s269, %s352 [#allocation9]
        %581 = vst [vmem:[%s580] sm:$0xff] %v579
        %v582 = vmax.f32 %v576, -0.01
        %v583 = vmin.f32 %v582, 0.01
        %v584 = vsub.f32 %v576, %v583
        %s585 = scalar_lea.vmem %s276, %s352 [#allocation10]
        %586 = vst [vmem:[%s585] sm:$0xff] %v584
        %s587 = sand.u32 %s110, 1
        %s588 = scalar_lea.sflag [#allocation4], %s587
        %s589 = sand.u32 %s110, 1
        %s590 = smul.addr %s589, 24
        %s591 = scalar_lea.vmem [#allocation9], %s590
        %s592 = sand.u32 %s136, 1
        %s593 = scalar_lea.sflag [#allocation11], %s592
        %s594 = sand.u32 %s136, 1
        %s595 = smul.addr %s594, 24
        %s596 = scalar_lea.vmem [#allocation10], %s595
        // Predicated region
        $region45: #{tpu_custom_call.1} parent=31 // pred_check
          %p597 = pneg %p120
        $region46: #{tpu_custom_call.1} parent=31 // pred_check_branch
          %599 = sbr.rel (%p597) target = $region48
        $region47: #{tpu_custom_call.1} parent=31 // pred_region
          %s601 = ssub.s32 384, 384
          %602 = vsyncadd %s588, %s601
          %s603 = smul.addr %s29, 128
          %s604 = scalar_lea.hbm %s3, %s603
          %s605 = sshll.u32 %s591, 4
          %s606 = int_to_ptr.vmem [resolvable:$true] %s605
          %611 = dma.vmem_to_hbm [thread:$0]  %s606, 384, %s604, %s588, 128, 256, 8
        $region48: #{tpu_custom_call.1} parent=31 // pred_fallthru
          _
        // Predicated region
        $region49: #{tpu_custom_call.1} parent=31 // pred_check
          %p612 = pneg %p146
        $region50: #{tpu_custom_call.1} parent=31 // pred_check_branch
          %614 = sbr.rel (%p612) target = $region52
        $region51: #{tpu_custom_call.1} parent=31 // pred_region
          %s616 = ssub.s32 384, 384
          %617 = vsyncadd %s593, %s616
          %s618 = smul.addr %s29, 128
          %s619 = scalar_lea.hbm %s4, %s618
          %s620 = sshll.u32 %s596, 4
          %s621 = int_to_ptr.vmem [resolvable:$true] %s620
          %626 = dma.vmem_to_hbm [thread:$0]  %s621, 384, %s619, %s593, 128, 256, 8
        $region52: #{tpu_custom_call.1} parent=31 // pred_fallthru
          _
      $region32: #{tpu_custom_call.1} parent=5 // pred_fallthru
        _
      %p627 = scmp.le.s32.totalorder 2, %s24
      // Predicated region
      $region53: #{tpu_custom_call.1} parent=5 // pred_check
        %p628 = pneg %p627
      $region54: #{tpu_custom_call.1} parent=5 // pred_check_branch
        %630 = sbr.rel (%p628) target = $region56
      $region55: #{tpu_custom_call.1} parent=5 // pred_region
        %s631 = ssub.s32 %s24, 2
        // Predicated region
        $region57: #{tpu_custom_call.1} parent=55 // pred_check
          %p632 = pneg %p126
        $region58: #{tpu_custom_call.1} parent=55 // pred_check_branch
          %634 = sbr.rel (%p632) target = $region60
        $region59: #{tpu_custom_call.1} parent=55 // pred_region
          %s635 = sand.u32 %s111, 1
          %s636 = scalar_lea.sflag [#allocation4], %s635
          %s637 = sand.u32 %s111, 1
          %s638 = smul.addr %s637, 24
          %s639 = scalar_lea.vmem [#allocation9], %s638
          %640 = dma.done %s636, 384
        $region60: #{tpu_custom_call.1} parent=55 // pred_fallthru
          _
        // Predicated region
        $region61: #{tpu_custom_call.1} parent=55 // pred_check
          %p641 = pneg %p152
        $region62: #{tpu_custom_call.1} parent=55 // pred_check_branch
          %643 = sbr.rel (%p641) target = $region64
        $region63: #{tpu_custom_call.1} parent=55 // pred_region
          %s644 = sand.u32 %s137, 1
          %s645 = scalar_lea.sflag [#allocation11], %s644
          %s646 = sand.u32 %s137, 1
          %s647 = smul.addr %s646, 24
          %s648 = scalar_lea.vmem [#allocation10], %s647
          %649 = dma.done %s645, 384
        $region64: #{tpu_custom_call.1} parent=55 // pred_fallthru
          _
      $region56: #{tpu_custom_call.1} parent=5 // pred_fallthru
        _
    $region6: #{tpu_custom_call.1} parent=1 // loop_footer
      %s28 = sadd.s32 1, %s24
    $region7: #{tpu_custom_call.1} parent=1 // loop_footer_branch
      %23 = sbr.rel target = $region3
    $region8: #{tpu_custom_call.1} parent=1 // loop_exit
      _
    %650 = vsyncpa [#allocation3], 1
    %s651 = scalar_lea.sflag [#allocation3], 1
    %652 = vsyncpa %s651, 1
    %653 = vsyncpa [#allocation8], 1
    %s654 = scalar_lea.sflag [#allocation8], 1
    %655 = vsyncpa %s654, 1
    %656 = vsyncpa [#allocation4], 1
    %s657 = scalar_lea.sflag [#allocation4], 1
    %658 = vsyncpa %s657, 1
    %659 = vsyncpa [#allocation11], 1
    %s660 = scalar_lea.sflag [#allocation11], 1
    %661 = vsyncpa %s660, 1
    %662 = vsyncpa [#allocation5], 1
    %s663 = scalar_lea.sflag [#allocation5], 1
    %664 = vsyncpa %s663, 1

</llo_original>
